<compile_context>
chip_gen: v7x
topology: tpu7x:2x2x1
jax: 0.10.0
libtpu: 0.0.40
codegen_flags: <defaults>
</compile_context>

<pallas_src>
import functools

import numpy as np
import jax
import jax.numpy as jnp
from jax.experimental import pallas as pl
from jax.experimental.pallas import tpu as pltpu


def _round_up(x, m):
    return ((x + m - 1) // m) * m


def _pick_tile(n, dtype, cap=1024):
    """Row tile: multiple of the sublane packing (8 for 4-byte, 16 for 2-byte
    dtypes), capped at `cap`; tiny inputs use the full row count (a block dim
    equal to the full array dim is always legal)."""
    mult = 8 if jnp.dtype(dtype).itemsize >= 4 else 16
    n = int(n)
    if n <= mult:
        return max(n, 1)
    return int(min(cap, _round_up(n, mult)))


def _mlp(x, w1, b1, w2, b2, alpha, out_dtype):
    """Fused Linear -> PReLU(scalar alpha) -> Linear, f32 accumulation."""
    h = jnp.dot(x, w1, preferred_element_type=jnp.float32) + b1.astype(jnp.float32)
    h = jnp.where(h > 0, h, alpha * h)          # PReLU, single shared parameter
    h = h.astype(w2.dtype)                      # keep 2nd matmul MXU-native for bf16
    out = jnp.dot(h, w2, preferred_element_type=jnp.float32) + b2.astype(jnp.float32)
    return out.astype(out_dtype)


def _encoder_kernel(grp_ref, tix_ref, alpha_ref,
                    xn_ref, wn1_ref, bn1_ref, wn2_ref, bn2_ref,
                    xe_ref, we1_ref, be1_ref, we2_ref, be2_ref,
                    on_ref, oe_ref):
    """One grid step processes one row tile of either the node or edge MLP."""
    grp = grp_ref[pl.program_id(0)]             # 0 = node encoder, 1 = edge encoder

    @pl.when(grp == 0)
    def _():
        on_ref[...] = _mlp(xn_ref[...], wn1_ref[...], bn1_ref[...],
                           wn2_ref[...], bn2_ref[...], alpha_ref[0], on_ref.dtype)

    @pl.when(grp == 1)
    def _():
        oe_ref[...] = _mlp(xe_ref[...], we1_ref[...], be1_ref[...],
                           we2_ref[...], be2_ref[...], alpha_ref[1], oe_ref.dtype)


def encoder_pallas(x, node_params, edge_attr, edge_params, *, tile_cap=1024):
    """Run both 2-layer MLPs in a single fused, row-tiled pallas_call."""
    nw1, nb1, nw2, nb2, na = node_params
    ew1, eb1, ew2, eb2, ea = edge_params

    n_nodes, kn = x.shape
    n_edges, ke = edge_attr.shape
    h = nw1.shape[1]

    # Degenerate empty groups: push one dummy row through, slice back to 0 rows.
    x_run = x if n_nodes > 0 else jnp.zeros((1, kn), x.dtype)
    e_run = edge_attr if n_edges > 0 else jnp.zeros((1, ke), edge_attr.dtype)
    nn, ne = x_run.shape[0], e_run.shape[0]

    tn = _pick_tile(nn, x_run.dtype, tile_cap)
    te = _pick_tile(ne, e_run.dtype, tile_cap)
    t_node = pl.cdiv(nn, tn)
    t_edge = pl.cdiv(ne, te)
    n_steps = t_node + t_edge

    # Per-step schedule (scalar prefetch -> SMEM): group id and within-group tile.
    grp = np.concatenate([np.zeros(t_node, np.int32), np.ones(t_edge, np.int32)])
    tix = np.concatenate([np.arange(t_node, dtype=np.int32),
                          np.arange(t_edge, dtype=np.int32)])
    alphas = jnp.concatenate([jnp.reshape(na, (-1,))[:1],
                              jnp.reshape(ea, (-1,))[:1]]).astype(jnp.float32)

    # Hold the inactive group's block index constant so no DMA is issued for it
    # during the other group's phase (Pallas skips unchanged block indices).
    def node_map(t, grp_ref, tix_ref, a_ref):
        return (jnp.where(grp_ref[t] == 0, tix_ref[t], t_node - 1), 0)

    def edge_map(t, grp_ref, tix_ref, a_ref):
        return (jnp.where(grp_ref[t] == 1, tix_ref[t], 0), 0)

    def const_map(t, grp_ref, tix_ref, a_ref):
        return (0, 0)

    isz = jnp.dtype(x_run.dtype).itemsize
    wsz = jnp.dtype(nw1.dtype).itemsize
    cost = pl.CostEstimate(
        flops=int(2 * (nn * kn * h + nn * h * h + ne * ke * h + ne * h * h)),
        transcendentals=0,
        bytes_accessed=int((x_run.size + e_run.size + nn * h + ne * h) * isz
                           + (nw1.size + nb1.size + nw2.size + nb2.size
                              + ew1.size + eb1.size + ew2.size + eb2.size) * wsz),
    )

    node_out, edge_out = pl.pallas_call(
        _encoder_kernel,
        out_shape=(jax.ShapeDtypeStruct((nn, h), x_run.dtype),
                   jax.ShapeDtypeStruct((ne, h), e_run.dtype)),
        grid_spec=pltpu.PrefetchScalarGridSpec(
            num_scalar_prefetch=3,              # group ids, tile ids, PReLU alphas
            grid=(n_steps,),
            in_specs=[
                # node MLP operands
                pl.BlockSpec((tn, kn), node_map),
                pl.BlockSpec((kn, h), const_map),
                pl.BlockSpec((1, h), const_map),
                pl.BlockSpec((h, h), const_map),
                pl.BlockSpec((1, h), const_map),
                # edge MLP operands
                pl.BlockSpec((te, ke), edge_map),
                pl.BlockSpec((ke, h), const_map),
                pl.BlockSpec((1, h), const_map),
                pl.BlockSpec((h, h), const_map),
                pl.BlockSpec((1, h), const_map),
            ],
            out_specs=[
                pl.BlockSpec((tn, h), node_map),
                pl.BlockSpec((te, h), edge_map),
            ],
        ),
        compiler_params=pltpu.CompilerParams(
            dimension_semantics=("arbitrary",),
        ),
        cost_estimate=cost,
    )(jnp.asarray(grp), jnp.asarray(tix), alphas,
      x_run, nw1, nb1, nw2, nb2,
      e_run, ew1, eb1, ew2, eb2)

    if n_nodes == 0:
        node_out = node_out[:0]
    if n_edges == 0:
        edge_out = edge_out[:0]
    return node_out, edge_out


def _init_linear(key, fan_in, fan_out, dtype):
    """torch.nn.Linear.reset_parameters(): U(-1/sqrt(fan_in), +1/sqrt(fan_in)).
    Weight returned already transposed to (fan_in, fan_out) for x @ W."""
    kw, kb = jax.random.split(key)
    bound = 1.0 / np.sqrt(fan_in)
    w = jax.random.uniform(kw, (fan_in, fan_out), dtype, minval=-bound, maxval=bound)
    b = jax.random.uniform(kb, (1, fan_out), dtype, minval=-bound, maxval=bound)
    return w, b


def make_encoder_params(key, n_atom_feats, n_bond_feats, n_hidden, dtype=jnp.float32):
    k1, k2, k3, k4 = jax.random.split(key, 4)
    node_w1, node_b1 = _init_linear(k1, n_atom_feats, n_hidden, dtype)
    node_w2, node_b2 = _init_linear(k2, n_hidden, n_hidden, dtype)
    edge_w1, edge_b1 = _init_linear(k3, n_bond_feats, n_hidden, dtype)
    edge_w2, edge_b2 = _init_linear(k4, n_hidden, n_hidden, dtype)
    node_alpha = jnp.full((1,), 0.25, jnp.float32)   # nn.PReLU() default
    edge_alpha = jnp.full((1,), 0.25, jnp.float32)
    return {
        "node": (node_w1, node_b1, node_w2, node_b2, node_alpha),
        "edge": (edge_w1, edge_b1, edge_w2, edge_b2, edge_alpha),
    }


def cast_params(params, dtype):
    def cast_group(g):
        w1, b1, w2, b2, a = g
        return (w1.astype(dtype), b1.astype(dtype), w2.astype(dtype),
                b2.astype(dtype), a)            # alpha stays f32 (SMEM scalar)
    return {"node": cast_group(params["node"]), "edge": cast_group(params["edge"])}


@jax.jit
def encoder_forward(params, x, edge_attr, glob, batch):
    """Pallas equivalent of Encoder.forward; glob/batch unused (as in PyTorch)."""
    return encoder_pallas(x, params["node"], edge_attr, params["edge"])


def _reference_forward(params, x, edge_attr):
    def mlp(xx, w1, b1, w2, b2, a):
        xx = xx.astype(jnp.float32)
        h = xx @ w1.astype(jnp.float32) + b1.astype(jnp.float32)
        h = jnp.where(h > 0, h, a[0] * h)
        return h @ w2.astype(jnp.float32) + b2.astype(jnp.float32)
    return (mlp(x, *params["node"]), mlp(edge_attr, *params["edge"]))


if __name__ == "__main__":
    n_atom_feats, n_bond_feats, n_global_feats, n_hidden = 16, 12, 4, 32
    n_nodes, n_edges, n_graphs = 8, 16, 2

    key = jax.random.PRNGKey(0)
    kp, kx, ke, kg = jax.random.split(key, 4)

    params = make_encoder_params(kp, n_atom_feats, n_bond_feats, n_hidden)

    x = jax.random.normal(kx, (n_nodes, n_atom_feats), jnp.float32)
    edge_attr = jax.random.normal(ke, (n_edges, n_bond_feats), jnp.float32)
    glob = jax.random.normal(kg, (n_graphs, n_global_feats), jnp.float32)
    batch = jnp.zeros((n_nodes,), jnp.int32)

    # f32 run (matches PyTorch default dtype/semantics)
    x_enc, e_enc = encoder_forward(params, x, edge_attr, glob, batch)
    jax.block_until_ready((x_enc, e_enc))
    x_ref, e_ref = _reference_forward(params, x, edge_attr)
    np.testing.assert_allclose(np.asarray(x_enc), np.asarray(x_ref), rtol=1e-5, atol=1e-5)
    np.testing.assert_allclose(np.asarray(e_enc), np.asarray(e_ref), rtol=1e-5, atol=1e-5)
    assert x_enc.shape == (n_nodes, n_hidden) and e_enc.shape == (n_edges, n_hidden)

    # bf16 run (halves HBM traffic for this bandwidth-bound kernel)
    params_bf16 = cast_params(params, jnp.bfloat16)
    x_b, e_b = encoder_forward(params_bf16, x.astype(jnp.bfloat16),
                               edge_attr.astype(jnp.bfloat16), glob, batch)
    jax.block_until_ready((x_b, e_b))
    np.testing.assert_allclose(np.asarray(x_b, np.float32), np.asarray(x_ref),
                               rtol=3e-2, atol=3e-2)
    np.testing.assert_allclose(np.asarray(e_b, np.float32), np.asarray(e_ref),
                               rtol=3e-2, atol=3e-2)

    # empty-edge-set guard (graph with no edges)
    x_enc0, e_enc0 = encoder_forward(params, x, jnp.zeros((0, n_bond_feats), jnp.float32),
                                     glob, batch)
    jax.block_until_ready((x_enc0, e_enc0))
    assert x_enc0.shape == (n_nodes, n_hidden) and e_enc0.shape == (0, n_hidden)

    print("KERNEL_OK")
</pallas_src>

<mosaic_0001>
module attributes {stable_mosaic.version = 11 : i64} {
  func.func @_encoder_kernel(%arg0: i32, %arg1: memref<2xi32, #tpu.memory_space<smem>>, %arg2: memref<2xi32, #tpu.memory_space<smem>>, %arg3: memref<2xf32, #tpu.memory_space<smem>>, %arg4: memref<8x16xf32, #tpu.memory_space<vmem>>, %arg5: memref<16x32xf32, #tpu.memory_space<vmem>>, %arg6: memref<1x32xf32, #tpu.memory_space<vmem>>, %arg7: memref<32x32xf32, #tpu.memory_space<vmem>>, %arg8: memref<1x32xf32, #tpu.memory_space<vmem>>, %arg9: memref<16x12xf32, #tpu.memory_space<vmem>>, %arg10: memref<12x32xf32, #tpu.memory_space<vmem>>, %arg11: memref<1x32xf32, #tpu.memory_space<vmem>>, %arg12: memref<32x32xf32, #tpu.memory_space<vmem>>, %arg13: memref<1x32xf32, #tpu.memory_space<vmem>>, %arg14: memref<8x32xf32, #tpu.memory_space<vmem>>, %arg15: memref<16x32xf32, #tpu.memory_space<vmem>>) attributes {dimension_semantics = [#tpu.dimension_semantics<arbitrary>], iteration_bounds = array<i64: 2>, scalar_prefetch = 3 : i64, scratch_operands = 0 : i64, tpu.core_type = #tpu.core_type<tc>, window_params = [{transform_indices = @transform_0, window_bounds = array<i64: 8, 16>}, {pipeline_mode = #tpu.pipeline_mode<synchronous>, transform_indices = @transform_1, window_bounds = array<i64: 16, 32>}, {pipeline_mode = #tpu.pipeline_mode<synchronous>, transform_indices = @transform_2, window_bounds = array<i64: 1, 32>}, {pipeline_mode = #tpu.pipeline_mode<synchronous>, transform_indices = @transform_3, window_bounds = array<i64: 32, 32>}, {pipeline_mode = #tpu.pipeline_mode<synchronous>, transform_indices = @transform_4, window_bounds = array<i64: 1, 32>}, {transform_indices = @transform_5, window_bounds = array<i64: 16, 12>}, {pipeline_mode = #tpu.pipeline_mode<synchronous>, transform_indices = @transform_6, window_bounds = array<i64: 12, 32>}, {pipeline_mode = #tpu.pipeline_mode<synchronous>, transform_indices = @transform_7, window_bounds = array<i64: 1, 32>}, {pipeline_mode = #tpu.pipeline_mode<synchronous>, transform_indices = @transform_8, window_bounds = array<i64: 32, 32>}, {pipeline_mode = #tpu.pipeline_mode<synchronous>, transform_indices = @transform_9, window_bounds = array<i64: 1, 32>}, {transform_indices = @transform_10, window_bounds = array<i64: 8, 32>}, {transform_indices = @transform_11, window_bounds = array<i64: 16, 32>}]} {
    %0 = arith.index_cast %arg0 : i32 to index
    %1 = memref.load %arg1[%0] : memref<2xi32, #tpu.memory_space<smem>>
    %c0_i32 = arith.constant 0 : i32
    %2 = arith.cmpi eq, %1, %c0_i32 : i32
    %3 = arith.extui %2 : i1 to i32
    %c0_i32_0 = arith.constant 0 : i32
    %4 = arith.cmpi ne, %3, %c0_i32_0 : i32
    scf.if %4 {
      %c0 = arith.constant 0 : index
      %c0_2 = arith.constant 0 : index
      %8 = vector.load %arg4[%c0, %c0_2] : memref<8x16xf32, #tpu.memory_space<vmem>>, vector<8x16xf32>
      %c0_3 = arith.constant 0 : index
      %c0_4 = arith.constant 0 : index
      %9 = vector.load %arg5[%c0_3, %c0_4] : memref<16x32xf32, #tpu.memory_space<vmem>>, vector<16x32xf32>
      %c0_5 = arith.constant 0 : index
      %c0_6 = arith.constant 0 : index
      %10 = vector.load %arg6[%c0_5, %c0_6] : memref<1x32xf32, #tpu.memory_space<vmem>>, vector<1x32xf32>
      %c0_7 = arith.constant 0 : index
      %c0_8 = arith.constant 0 : index
      %11 = vector.load %arg7[%c0_7, %c0_8] : memref<32x32xf32, #tpu.memory_space<vmem>>, vector<32x32xf32>
      %c0_9 = arith.constant 0 : index
      %c0_10 = arith.constant 0 : index
      %12 = vector.load %arg8[%c0_9, %c0_10] : memref<1x32xf32, #tpu.memory_space<vmem>>, vector<1x32xf32>
      %c0_11 = arith.constant 0 : index
      %13 = memref.load %arg3[%c0_11] : memref<2xf32, #tpu.memory_space<smem>>
      %cst = arith.constant dense<0.000000e+00> : vector<8x32xf32>
      %14 = tpu.matmul %8, %9, %cst {dimension_numbers = #tpu.dot_dimension_numbers<[1], [0], [0], [1], [0, 0, 1, 1], [], []>} : vector<8x16xf32>, vector<16x32xf32>, vector<8x32xf32> -> vector<8x32xf32>
      %15 = vector.broadcast %10 : vector<1x32xf32> to vector<8x32xf32>
      %16 = arith.addf %14, %15 : vector<8x32xf32>
      %cst_12 = arith.constant 0.000000e+00 : f32
      %17 = vector.broadcast %cst_12 : f32 to vector<8x32xf32>
      %18 = arith.cmpf ogt, %16, %17 : vector<8x32xf32>
      %19 = vector.broadcast %13 : f32 to vector<8x32xf32>
      %20 = arith.mulf %19, %16 : vector<8x32xf32>
      %21 = arith.select %18, %16, %20 : vector<8x32xi1>, vector<8x32xf32>
      %cst_13 = arith.constant dense<0.000000e+00> : vector<8x32xf32>
      %22 = tpu.matmul %21, %11, %cst_13 {dimension_numbers = #tpu.dot_dimension_numbers<[1], [0], [0], [1], [0, 0, 1, 1], [], []>} : vector<8x32xf32>, vector<32x32xf32>, vector<8x32xf32> -> vector<8x32xf32>
      %23 = vector.broadcast %12 : vector<1x32xf32> to vector<8x32xf32>
      %24 = arith.addf %22, %23 : vector<8x32xf32>
      %c0_14 = arith.constant 0 : index
      %c0_15 = arith.constant 0 : index
      %25 = vector.load %arg14[%c0_14, %c0_15] : memref<8x32xf32, #tpu.memory_space<vmem>>, vector<8x32xf32>
      tpu.vector_store %arg14[%c0_14, %c0_15], %24 {strides = array<i32>} : memref<8x32xf32, #tpu.memory_space<vmem>>, vector<8x32xf32>,
    } else {
    }
    %c1_i32 = arith.constant 1 : i32
    %5 = arith.cmpi eq, %1, %c1_i32 : i32
    %6 = arith.extui %5 : i1 to i32
    %c0_i32_1 = arith.constant 0 : i32
    %7 = arith.cmpi ne, %6, %c0_i32_1 : i32
    scf.if %7 {
      %c0 = arith.constant 0 : index
      %c0_2 = arith.constant 0 : index
      %8 = vector.load %arg9[%c0, %c0_2] : memref<16x12xf32, #tpu.memory_space<vmem>>, vector<16x12xf32>
      %c0_3 = arith.constant 0 : index
      %c0_4 = arith.constant 0 : index
      %9 = vector.load %arg10[%c0_3, %c0_4] : memref<12x32xf32, #tpu.memory_space<vmem>>, vector<12x32xf32>
      %c0_5 = arith.constant 0 : index
      %c0_6 = arith.constant 0 : index
      %10 = vector.load %arg11[%c0_5, %c0_6] : memref<1x32xf32, #tpu.memory_space<vmem>>, vector<1x32xf32>
      %c0_7 = arith.constant 0 : index
      %c0_8 = arith.constant 0 : index
      %11 = vector.load %arg12[%c0_7, %c0_8] : memref<32x32xf32, #tpu.memory_space<vmem>>, vector<32x32xf32>
      %c0_9 = arith.constant 0 : index
      %c0_10 = arith.constant 0 : index
      %12 = vector.load %arg13[%c0_9, %c0_10] : memref<1x32xf32, #tpu.memory_space<vmem>>, vector<1x32xf32>
      %c1 = arith.constant 1 : index
      %13 = memref.load %arg3[%c1] : memref<2xf32, #tpu.memory_space<smem>>
      %cst = arith.constant dense<0.000000e+00> : vector<16x32xf32>
      %14 = tpu.matmul %8, %9, %cst {dimension_numbers = #tpu.dot_dimension_numbers<[1], [0], [0], [1], [0, 0, 1, 1], [], []>} : vector<16x12xf32>, vector<12x32xf32>, vector<16x32xf32> -> vector<16x32xf32>
      %15 = vector.broadcast %10 : vector<1x32xf32> to vector<16x32xf32>
      %16 = arith.addf %14, %15 : vector<16x32xf32>
      %cst_11 = arith.constant 0.000000e+00 : f32
      %17 = vector.broadcast %cst_11 : f32 to vector<16x32xf32>
      %18 = arith.cmpf ogt, %16, %17 : vector<16x32xf32>
      %19 = vector.broadcast %13 : f32 to vector<16x32xf32>
      %20 = arith.mulf %19, %16 : vector<16x32xf32>
      %21 = arith.select %18, %16, %20 : vector<16x32xi1>, vector<16x32xf32>
      %cst_12 = arith.constant dense<0.000000e+00> : vector<16x32xf32>
      %22 = tpu.matmul %21, %11, %cst_12 {dimension_numbers = #tpu.dot_dimension_numbers<[1], [0], [0], [1], [0, 0, 1, 1], [], []>} : vector<16x32xf32>, vector<32x32xf32>, vector<16x32xf32> -> vector<16x32xf32>
      %23 = vector.broadcast %12 : vector<1x32xf32> to vector<16x32xf32>
      %24 = arith.addf %22, %23 : vector<16x32xf32>
      %c0_13 = arith.constant 0 : index
      %c0_14 = arith.constant 0 : index
      %25 = vector.load %arg15[%c0_13, %c0_14] : memref<16x32xf32, #tpu.memory_space<vmem>>, vector<16x32xf32>
      tpu.vector_store %arg15[%c0_13, %c0_14], %24 {strides = array<i32>} : memref<16x32xf32, #tpu.memory_space<vmem>>, vector<16x32xf32>,
    } else {
    }
    return
  }
  func.func @transform_0(%arg0: i32, %arg1: memref<2xi32, #tpu.memory_space<smem>>, %arg2: memref<2xi32, #tpu.memory_space<smem>>, %arg3: memref<2xf32, #tpu.memory_space<smem>>) -> (i32, i32) {
    %0 = arith.index_cast %arg0 : i32 to index
    %1 = memref.load %arg1[%0] : memref<2xi32, #tpu.memory_space<smem>>
    %c0_i32 = arith.constant 0 : i32
    %2 = arith.cmpi eq, %1, %c0_i32 : i32
    %3 = arith.index_cast %arg0 : i32 to index
    %4 = memref.load %arg2[%3] : memref<2xi32, #tpu.memory_space<smem>>
    %c0_i32_0 = arith.constant 0 : i32
    %5 = arith.select %2, %4, %c0_i32_0 : i32
    %c0_i32_1 = arith.constant 0 : i32
    %c0_i32_2 = arith.constant 0 : i32
    return %5, %c0_i32_1 : i32, i32
  }
  func.func @transform_1(%arg0: i32, %arg1: memref<2xi32, #tpu.memory_space<smem>>, %arg2: memref<2xi32, #tpu.memory_space<smem>>, %arg3: memref<2xf32, #tpu.memory_space<smem>>) -> (i32, i32) {
    %c0_i32 = arith.constant 0 : i32
    %c0_i32_0 = arith.constant 0 : i32
    %c0_i32_1 = arith.constant 0 : i32
    return %c0_i32, %c0_i32_0 : i32, i32
  }
  func.func @transform_2(%arg0: i32, %arg1: memref<2xi32, #tpu.memory_space<smem>>, %arg2: memref<2xi32, #tpu.memory_space<smem>>, %arg3: memref<2xf32, #tpu.memory_space<smem>>) -> (i32, i32) {
    %c0_i32 = arith.constant 0 : i32
    %c0_i32_0 = arith.constant 0 : i32
    %c0_i32_1 = arith.constant 0 : i32
    return %c0_i32, %c0_i32_0 : i32, i32
  }
  func.func @transform_3(%arg0: i32, %arg1: memref<2xi32, #tpu.memory_space<smem>>, %arg2: memref<2xi32, #tpu.memory_space<smem>>, %arg3: memref<2xf32, #tpu.memory_space<smem>>) -> (i32, i32) {
    %c0_i32 = arith.constant 0 : i32
    %c0_i32_0 = arith.constant 0 : i32
    %c0_i32_1 = arith.constant 0 : i32
    return %c0_i32, %c0_i32_0 : i32, i32
  }
  func.func @transform_4(%arg0: i32, %arg1: memref<2xi32, #tpu.memory_space<smem>>, %arg2: memref<2xi32, #tpu.memory_space<smem>>, %arg3: memref<2xf32, #tpu.memory_space<smem>>) -> (i32, i32) {
    %c0_i32 = arith.constant 0 : i32
    %c0_i32_0 = arith.constant 0 : i32
    %c0_i32_1 = arith.constant 0 : i32
    return %c0_i32, %c0_i32_0 : i32, i32
  }
  func.func @transform_5(%arg0: i32, %arg1: memref<2xi32, #tpu.memory_space<smem>>, %arg2: memref<2xi32, #tpu.memory_space<smem>>, %arg3: memref<2xf32, #tpu.memory_space<smem>>) -> (i32, i32) {
    %0 = arith.index_cast %arg0 : i32 to index
    %1 = memref.load %arg1[%0] : memref<2xi32, #tpu.memory_space<smem>>
    %c1_i32 = arith.constant 1 : i32
    %2 = arith.cmpi eq, %1, %c1_i32 : i32
    %3 = arith.index_cast %arg0 : i32 to index
    %4 = memref.load %arg2[%3] : memref<2xi32, #tpu.memory_space<smem>>
    %c0_i32 = arith.constant 0 : i32
    %5 = arith.select %2, %4, %c0_i32 : i32
    %c0_i32_0 = arith.constant 0 : i32
    %c0_i32_1 = arith.constant 0 : i32
    return %5, %c0_i32_0 : i32, i32
  }
  func.func @transform_6(%arg0: i32, %arg1: memref<2xi32, #tpu.memory_space<smem>>, %arg2: memref<2xi32, #tpu.memory_space<smem>>, %arg3: memref<2xf32, #tpu.memory_space<smem>>) -> (i32, i32) {
    %c0_i32 = arith.constant 0 : i32
    %c0_i32_0 = arith.constant 0 : i32
    %c0_i32_1 = arith.constant 0 : i32
    return %c0_i32, %c0_i32_0 : i32, i32
  }
  func.func @transform_7(%arg0: i32, %arg1: memref<2xi32, #tpu.memory_space<smem>>, %arg2: memref<2xi32, #tpu.memory_space<smem>>, %arg3: memref<2xf32, #tpu.memory_space<smem>>) -> (i32, i32) {
    %c0_i32 = arith.constant 0 : i32
    %c0_i32_0 = arith.constant 0 : i32
    %c0_i32_1 = arith.constant 0 : i32
    return %c0_i32, %c0_i32_0 : i32, i32
  }
  func.func @transform_8(%arg0: i32, %arg1: memref<2xi32, #tpu.memory_space<smem>>, %arg2: memref<2xi32, #tpu.memory_space<smem>>, %arg3: memref<2xf32, #tpu.memory_space<smem>>) -> (i32, i32) {
    %c0_i32 = arith.constant 0 : i32
    %c0_i32_0 = arith.constant 0 : i32
    %c0_i32_1 = arith.constant 0 : i32
    return %c0_i32, %c0_i32_0 : i32, i32
  }
  func.func @transform_9(%arg0: i32, %arg1: memref<2xi32, #tpu.memory_space<smem>>, %arg2: memref<2xi32, #tpu.memory_space<smem>>, %arg3: memref<2xf32, #tpu.memory_space<smem>>) -> (i32, i32) {
    %c0_i32 = arith.constant 0 : i32
    %c0_i32_0 = arith.constant 0 : i32
    %c0_i32_1 = arith.constant 0 : i32
    return %c0_i32, %c0_i32_0 : i32, i32
  }
  func.func @transform_10(%arg0: i32, %arg1: memref<2xi32, #tpu.memory_space<smem>>, %arg2: memref<2xi32, #tpu.memory_space<smem>>, %arg3: memref<2xf32, #tpu.memory_space<smem>>) -> (i32, i32) {
    %0 = arith.index_cast %arg0 : i32 to index
    %1 = memref.load %arg1[%0] : memref<2xi32, #tpu.memory_space<smem>>
    %c0_i32 = arith.constant 0 : i32
    %2 = arith.cmpi eq, %1, %c0_i32 : i32
    %3 = arith.index_cast %arg0 : i32 to index
    %4 = memref.load %arg2[%3] : memref<2xi32, #tpu.memory_space<smem>>
    %c0_i32_0 = arith.constant 0 : i32
    %5 = arith.select %2, %4, %c0_i32_0 : i32
    %c0_i32_1 = arith.constant 0 : i32
    %c0_i32_2 = arith.constant 0 : i32
    return %5, %c0_i32_1 : i32, i32
  }
  func.func @transform_11(%arg0: i32, %arg1: memref<2xi32, #tpu.memory_space<smem>>, %arg2: memref<2xi32, #tpu.memory_space<smem>>, %arg3: memref<2xf32, #tpu.memory_space<smem>>) -> (i32, i32) {
    %0 = arith.index_cast %arg0 : i32 to index
    %1 = memref.load %arg1[%0] : memref<2xi32, #tpu.memory_space<smem>>
    %c1_i32 = arith.constant 1 : i32
    %2 = arith.cmpi eq, %1, %c1_i32 : i32
    %3 = arith.index_cast %arg0 : i32 to index
    %4 = memref.load %arg2[%3] : memref<2xi32, #tpu.memory_space<smem>>
    %c0_i32 = arith.constant 0 : i32
    %5 = arith.select %2, %4, %c0_i32 : i32
    %c0_i32_0 = arith.constant 0 : i32
    %c0_i32_1 = arith.constant 0 : i32
    return %5, %c0_i32_0 : i32, i32
  }
}

</mosaic_0001>

<llo_original>
// kernel: encoder_forward.1
$region0: #{encoder_forward.1}
  #allocation0 [shape = 'u32[]', space=smem, size = 0x4, offset = 0x4, fixed_abs, tag = 'smem constant byte address 0x4 - core index']
  #allocation1 [shape = 'u32[144,128]{1,0:T(1,128)}', space=vmem, size = 0x12000, scoped, tag = 'internal scratch']
  #allocation2 [shape = 's32[1]{0}', space=sflag, size = 0x4, scoped, tag = 'scoped memory for encoder_forward.1']
  #allocation3 [shape = 'u8[512]{0}', space=smem, size = 0x200, scoped, tag = 'prefetched SMEM operand 0']
  #allocation4 [shape = 'u8[512]{0}', space=smem, size = 0x200, scoped, tag = 'prefetched SMEM operand 1']
  #allocation5 [shape = 'u8[512]{0}', space=smem, size = 0x200, scoped, tag = 'prefetched SMEM operand 2']
  %s0 = inlined_call_operand.vmem [shape: s32[2], index: 0, kind: input, shape index: {}]
  %s1 = inlined_call_operand.vmem [shape: s32[2], index: 1, kind: input, shape index: {}]
  %s2 = inlined_call_operand.vmem [shape: f32[2], index: 2, kind: input, shape index: {}]
  %s3 = inlined_call_operand.hbm [shape: f32[8,16], index: 3, kind: input, shape index: {}]
  %s4 = inlined_call_operand.hbm [shape: f32[16,32], index: 4, kind: input, shape index: {}]
  %s5 = inlined_call_operand.vmem [shape: f32[1,32], index: 5, kind: input, shape index: {}]
  %s6 = inlined_call_operand.vmem [shape: f32[32,32], index: 6, kind: input, shape index: {}]
  %s7 = inlined_call_operand.hbm [shape: f32[1,32], index: 7, kind: input, shape index: {}]
  %s8 = inlined_call_operand.vmem [shape: f32[16,12], index: 8, kind: input, shape index: {}]
  %s9 = inlined_call_operand.hbm [shape: f32[12,32], index: 9, kind: input, shape index: {}]
  %s10 = inlined_call_operand.hbm [shape: f32[1,32], index: 10, kind: input, shape index: {}]
  %s11 = inlined_call_operand.hbm [shape: f32[32,32], index: 11, kind: input, shape index: {}]
  %s12 = inlined_call_operand.hbm [shape: f32[1,32], index: 12, kind: input, shape index: {}]
  %s13 = inlined_call_operand.hbm [shape: f32[8,32], index: 13, kind: output, shape index: {0}]
  %s14 = inlined_call_operand.hbm [shape: f32[16,32], index: 14, kind: output, shape index: {1}]
  %15 = xla_tuple %s13, %s14
  %s16 = sld [smem:[#allocation0]]
  $region117: #{encoder_forward.1} parent=0
    _
  %s18 = ssub.s32 1, %s16
  %s19 = scalar_select 0, %s18, %s16
  %s20 = sshll.u32 %s0, 4
  %s21 = int_to_ptr.vmem [resolvable:$true] %s20
  %23 = dma.vmem_to_smem %s21, 16, [#allocation3], [#allocation2]
  %s24 = sshll.u32 %s1, 4
  %s25 = int_to_ptr.vmem [resolvable:$true] %s24
  %27 = dma.vmem_to_smem %s25, 16, [#allocation4], [#allocation2]
  %s28 = sshll.u32 %s2, 4
  %s29 = int_to_ptr.vmem [resolvable:$true] %s28
  %31 = dma.vmem_to_smem %s29, 16, [#allocation5], [#allocation2]
  %32 = dma.done [#allocation2], 48
  %33 = sfence
  $region1: #{encoder_forward.1} parent=0
    #allocation6 [shape = 'u8[8192]{0}', space=vmem, size = 0x2000, scoped, tag = 'input window, operand 3']
    #allocation7 [shape = 's32[2]{0}', space=sflag, size = 0x8, scoped, tag = 'scoped memory for encoder_forward.1']
    #allocation8 [shape = 's32[2]{0}', space=sflag, size = 0x8, scoped, tag = 'scoped memory for encoder_forward.1']
    #allocation9 [shape = 'u8[8192]{0}', space=vmem, size = 0x2000, scoped, tag = 'input window, operand 4, single buffered']
    #allocation10 [shape = 's32[1]{0}', space=sflag, size = 0x4, scoped, tag = 'scoped memory for encoder_forward.1']
    #allocation11 [shape = 'u8[512]{0}', space=vmem, size = 0x400, scoped, tag = 'input window, operand 7, single buffered']
    #allocation12 [shape = 'u8[8192]{0}', space=vmem, size = 0x2000, scoped, tag = 'input window, operand 9, single buffered']
    #allocation13 [shape = 's32[1]{0}', space=sflag, size = 0x4, scoped, tag = 'scoped memory for encoder_forward.1']
    #allocation14 [shape = 'u8[512]{0}', space=vmem, size = 0x400, scoped, tag = 'input window, operand 10, single buffered']
    #allocation15 [shape = 'u8[16384]{0}', space=vmem, size = 0x4000, scoped, tag = 'input window, operand 11, single buffered']
    #allocation16 [shape = 's32[1]{0}', space=sflag, size = 0x4, scoped, tag = 'scoped memory for encoder_forward.1']
    #allocation17 [shape = 'u8[512]{0}', space=vmem, size = 0x400, scoped, tag = 'input window, operand 12, single buffered']
    #allocation18 [shape = 'u8[8192]{0}', space=vmem, size = 0x2000, scoped, tag = 'output window, operand 0']
    #allocation19 [shape = 'u8[16384]{0}', space=vmem, size = 0x4000, scoped, tag = 'output window, operand 1']
    #allocation20 [shape = 's32[2]{0}', space=sflag, size = 0x8, scoped, tag = 'scoped memory for encoder_forward.1']
    %34 = vsyncpa [#allocation7], 0
    %s35 = scalar_lea.sflag [#allocation7], 1
    %36 = vsyncpa %s35, 0
    %37 = vsyncpa [#allocation10], 0
    %38 = vsyncpa [#allocation13], 0
    %39 = vsyncpa [#allocation16], 0
    %40 = vsyncpa [#allocation8], 0
    %s41 = scalar_lea.sflag [#allocation8], 1
    %42 = vsyncpa %s41, 0
    %43 = vsyncpa [#allocation20], 0
    %s44 = scalar_lea.sflag [#allocation20], 1
    %45 = vsyncpa %s44, 0
    loop: start=0, step=1, limit=4
    $region2: #{encoder_forward.1} parent=1 // loop_pre_header
      _
    $region3: #{encoder_forward.1} parent=1 // loop_header
      %s47 = sphi 0, %s51
      %p48 = scmp.ge.s32.totalorder %s47, 4
      %s65 = sphi 0, %s67
      %s68 = sphi 0, %s65
      %s69 = sphi 0, %s68
      %s85 = sphi 0, %s69
      %s89 = sphi 0, %s89
      %s91 = sphi 0, %s89
      %s92 = sphi 0, %s91
      %s106 = sphi 0, %s92
      %s110 = sphi 0, %s110
      %s112 = sphi 0, %s110
      %s113 = sphi 0, %s112
      %s127 = sphi 0, %s113
      %s131 = sphi 0, %s131
      %s133 = sphi 0, %s131
      %s134 = sphi 0, %s133
      %s148 = sphi 0, %s134
      %s152 = sphi 0, %s152
      %s154 = sphi 0, %s152
      %s155 = sphi 0, %s154
      %s169 = sphi 0, %s155
      %s183 = sphi 0, %s185
      %s186 = sphi 0, %s183
      %s187 = sphi 0, %s186
      %s203 = sphi 0, %s187
      %s207 = sphi 0, %s207
      %s209 = sphi 0, %s207
      %s210 = sphi 0, %s209
      %s224 = sphi 0, %s210
      %s228 = sphi 0, %s228
      %s230 = sphi 0, %s228
      %s231 = sphi 0, %s230
      %s245 = sphi 0, %s231
      %s249 = sphi 0, %s249
      %s251 = sphi 0, %s249
      %s252 = sphi 0, %s251
      %s266 = sphi 0, %s252
      %s270 = sphi 0, %s270
      %s272 = sphi 0, %s270
      %s273 = sphi 0, %s272
      %s287 = sphi 0, %s273
      %s301 = sphi 0, %s303
      %s304 = sphi 0, %s301
      %s305 = sphi 0, %s304
      %s321 = sphi 0, %s305
      %s335 = sphi 0, %s337
      %s338 = sphi 0, %s335
      %s339 = sphi 0, %s338
      %s355 = sphi 0, %s339
    $region4: #{encoder_forward.1} parent=1 // loop_header_branch
      %50 = sbr.rel (%p48) target = $region8
    $region5: #{encoder_forward.1} parent=1 // loop_body
      %s52 = ssub.s32 %s47, 1
      %s53 = ssub.s32 %s47, 2
      %s54 = sadd.s32 %s47, 1
      %s55 = sld [smem:[#allocation3 + %s47]]
      %p56 = scmp.eq.s32.totalorder %s55, 0
      %s57 = sld [smem:[#allocation4 + %s47]]
      %s58 = scalar_select %p56, %s57, 0
      %s59 = sld [smem:[#allocation3 + %s54]]
      %p60 = scmp.eq.s32.totalorder %s59, 0
      %s61 = sld [smem:[#allocation4 + %s54]]
      %s62 = scalar_select %p60, %s61, 0
      %s63 = ssub.s32 %s58, %s62
      %p64 = scmp.eq.s32.totalorder %s63, 0
      %s66 = sadd.s32 %s65, 1
      %s67 = scalar_select %p64, %s65, %s66
      %p70 = pneg %p64
      %p71 = scmp.eq.s32.totalorder %s47, 1
      %p72 = por %p70, %p71
      %p73 = scmp.ne.s32.totalorder %s65, %s68
      %p74 = scmp.eq.s32.totalorder %s47, 0
      %p75 = por %p73, %p74
      %p76 = scmp.ne.s32.totalorder %s65, %s68
      %p77 = scmp.eq.s32.totalorder %s52, 1
      %p78 = por %p76, %p77
      %p79 = scmp.ne.s32.totalorder %s68, %s69
      %p80 = scmp.eq.s32.totalorder %s52, 0
      %p81 = por %p79, %p80
      %p82 = scmp.ne.s32.totalorder %s68, %s69
      %p83 = scmp.eq.s32.totalorder %s53, 1
      %p84 = por %p82, %p83
      %p86 = scmp.ne.s32.totalorder %s69, %s85
      %p87 = scmp.eq.s32.totalorder %s53, 0
      %p88 = por %p86, %p87
      %s90 = sadd.s32 %s89, 1
      %p93 = scmp.eq.s32.totalorder %s47, 1
      %p94 = scmp.ne.s32.totalorder %s89, %s91
      %p95 = scmp.eq.s32.totalorder %s47, 0
      %p96 = por %p94, %p95
      %p97 = scmp.ne.s32.totalorder %s89, %s91
      %p98 = scmp.eq.s32.totalorder %s52, 1
      %p99 = por %p97, %p98
      %p100 = scmp.ne.s32.totalorder %s91, %s92
      %p101 = scmp.eq.s32.totalorder %s52, 0
      %p102 = por %p100, %p101
      %p103 = scmp.ne.s32.totalorder %s91, %s92
      %p104 = scmp.eq.s32.totalorder %s53, 1
      %p105 = por %p103, %p104
      %p107 = scmp.ne.s32.totalorder %s92, %s106
      %p108 = scmp.eq.s32.totalorder %s53, 0
      %p109 = por %p107, %p108
      %s111 = sadd.s32 %s110, 1
      %p114 = scmp.eq.s32.totalorder %s47, 1
      %p115 = scmp.ne.s32.totalorder %s110, %s112
      %p116 = scmp.eq.s32.totalorder %s47, 0
      %p117 = por %p115, %p116
      %p118 = scmp.ne.s32.totalorder %s110, %s112
      %p119 = scmp.eq.s32.totalorder %s52, 1
      %p120 = por %p118, %p119
      %p121 = scmp.ne.s32.totalorder %s112, %s113
      %p122 = scmp.eq.s32.totalorder %s52, 0
      %p123 = por %p121, %p122
      %p124 = scmp.ne.s32.totalorder %s112, %s113
      %p125 = scmp.eq.s32.totalorder %s53, 1
      %p126 = por %p124, %p125
      %p128 = scmp.ne.s32.totalorder %s113, %s127
      %p129 = scmp.eq.s32.totalorder %s53, 0
      %p130 = por %p128, %p129
      %s132 = sadd.s32 %s131, 1
      %p135 = scmp.eq.s32.totalorder %s47, 1
      %p136 = scmp.ne.s32.totalorder %s131, %s133
      %p137 = scmp.eq.s32.totalorder %s47, 0
      %p138 = por %p136, %p137
      %p139 = scmp.ne.s32.totalorder %s131, %s133
      %p140 = scmp.eq.s32.totalorder %s52, 1
      %p141 = por %p139, %p140
      %p142 = scmp.ne.s32.totalorder %s133, %s134
      %p143 = scmp.eq.s32.totalorder %s52, 0
      %p144 = por %p142, %p143
      %p145 = scmp.ne.s32.totalorder %s133, %s134
      %p146 = scmp.eq.s32.totalorder %s53, 1
      %p147 = por %p145, %p146
      %p149 = scmp.ne.s32.totalorder %s134, %s148
      %p150 = scmp.eq.s32.totalorder %s53, 0
      %p151 = por %p149, %p150
      %s153 = sadd.s32 %s152, 1
      %p156 = scmp.eq.s32.totalorder %s47, 1
      %p157 = scmp.ne.s32.totalorder %s152, %s154
      %p158 = scmp.eq.s32.totalorder %s47, 0
      %p159 = por %p157, %p158
      %p160 = scmp.ne.s32.totalorder %s152, %s154
      %p161 = scmp.eq.s32.totalorder %s52, 1
      %p162 = por %p160, %p161
      %p163 = scmp.ne.s32.totalorder %s154, %s155
      %p164 = scmp.eq.s32.totalorder %s52, 0
      %p165 = por %p163, %p164
      %p166 = scmp.ne.s32.totalorder %s154, %s155
      %p167 = scmp.eq.s32.totalorder %s53, 1
      %p168 = por %p166, %p167
      %p170 = scmp.ne.s32.totalorder %s155, %s169
      %p171 = scmp.eq.s32.totalorder %s53, 0
      %p172 = por %p170, %p171
      %s173 = sld [smem:[#allocation3 + %s47]]
      %p174 = scmp.eq.s32.totalorder %s173, 1
      %s175 = sld [smem:[#allocation4 + %s47]]
      %s176 = scalar_select %p174, %s175, 0
      %s177 = sld [smem:[#allocation3 + %s54]]
      %p178 = scmp.eq.s32.totalorder %s177, 1
      %s179 = sld [smem:[#allocation4 + %s54]]
      %s180 = scalar_select %p178, %s179, 0
      %s181 = ssub.s32 %s176, %s180
      %p182 = scmp.eq.s32.totalorder %s181, 0
      %s184 = sadd.s32 %s183, 1
      %s185 = scalar_select %p182, %s183, %s184
      %p188 = pneg %p182
      %p189 = scmp.eq.s32.totalorder %s47, 1
      %p190 = por %p188, %p189
      %p191 = scmp.ne.s32.totalorder %s183, %s186
      %p192 = scmp.eq.s32.totalorder %s47, 0
      %p193 = por %p191, %p192
      %p194 = scmp.ne.s32.totalorder %s183, %s186
      %p195 = scmp.eq.s32.totalorder %s52, 1
      %p196 = por %p194, %p195
      %p197 = scmp.ne.s32.totalorder %s186, %s187
      %p198 = scmp.eq.s32.totalorder %s52, 0
      %p199 = por %p197, %p198
      %p200 = scmp.ne.s32.totalorder %s186, %s187
      %p201 = scmp.eq.s32.totalorder %s53, 1
      %p202 = por %p200, %p201
      %p204 = scmp.ne.s32.totalorder %s187, %s203
      %p205 = scmp.eq.s32.totalorder %s53, 0
      %p206 = por %p204, %p205
      %s208 = sadd.s32 %s207, 1
      %p211 = scmp.eq.s32.totalorder %s47, 1
      %p212 = scmp.ne.s32.totalorder %s207, %s209
      %p213 = scmp.eq.s32.totalorder %s47, 0
      %p214 = por %p212, %p213
      %p215 = scmp.ne.s32.totalorder %s207, %s209
      %p216 = scmp.eq.s32.totalorder %s52, 1
      %p217 = por %p215, %p216
      %p218 = scmp.ne.s32.totalorder %s209, %s210
      %p219 = scmp.eq.s32.totalorder %s52, 0
      %p220 = por %p218, %p219
      %p221 = scmp.ne.s32.totalorder %s209, %s210
      %p222 = scmp.eq.s32.totalorder %s53, 1
      %p223 = por %p221, %p222
      %p225 = scmp.ne.s32.totalorder %s210, %s224
      %p226 = scmp.eq.s32.totalorder %s53, 0
      %p227 = por %p225, %p226
      %s229 = sadd.s32 %s228, 1
      %p232 = scmp.eq.s32.totalorder %s47, 1
      %p233 = scmp.ne.s32.totalorder %s228, %s230
      %p234 = scmp.eq.s32.totalorder %s47, 0
      %p235 = por %p233, %p234
      %p236 = scmp.ne.s32.totalorder %s228, %s230
      %p237 = scmp.eq.s32.totalorder %s52, 1
      %p238 = por %p236, %p237
      %p239 = scmp.ne.s32.totalorder %s230, %s231
      %p240 = scmp.eq.s32.totalorder %s52, 0
      %p241 = por %p239, %p240
      %p242 = scmp.ne.s32.totalorder %s230, %s231
      %p243 = scmp.eq.s32.totalorder %s53, 1
      %p244 = por %p242, %p243
      %p246 = scmp.ne.s32.totalorder %s231, %s245
      %p247 = scmp.eq.s32.totalorder %s53, 0
      %p248 = por %p246, %p247
      %s250 = sadd.s32 %s249, 1
      %p253 = scmp.eq.s32.totalorder %s47, 1
      %p254 = scmp.ne.s32.totalorder %s249, %s251
      %p255 = scmp.eq.s32.totalorder %s47, 0
      %p256 = por %p254, %p255
      %p257 = scmp.ne.s32.totalorder %s249, %s251
      %p258 = scmp.eq.s32.totalorder %s52, 1
      %p259 = por %p257, %p258
      %p260 = scmp.ne.s32.totalorder %s251, %s252
      %p261 = scmp.eq.s32.totalorder %s52, 0
      %p262 = por %p260, %p261
      %p263 = scmp.ne.s32.totalorder %s251, %s252
      %p264 = scmp.eq.s32.totalorder %s53, 1
      %p265 = por %p263, %p264
      %p267 = scmp.ne.s32.totalorder %s252, %s266
      %p268 = scmp.eq.s32.totalorder %s53, 0
      %p269 = por %p267, %p268
      %s271 = sadd.s32 %s270, 1
      %p274 = scmp.eq.s32.totalorder %s47, 1
      %p275 = scmp.ne.s32.totalorder %s270, %s272
      %p276 = scmp.eq.s32.totalorder %s47, 0
      %p277 = por %p275, %p276
      %p278 = scmp.ne.s32.totalorder %s270, %s272
      %p279 = scmp.eq.s32.totalorder %s52, 1
      %p280 = por %p278, %p279
      %p281 = scmp.ne.s32.totalorder %s272, %s273
      %p282 = scmp.eq.s32.totalorder %s52, 0
      %p283 = por %p281, %p282
      %p284 = scmp.ne.s32.totalorder %s272, %s273
      %p285 = scmp.eq.s32.totalorder %s53, 1
      %p286 = por %p284, %p285
      %p288 = scmp.ne.s32.totalorder %s273, %s287
      %p289 = scmp.eq.s32.totalorder %s53, 0
      %p290 = por %p288, %p289
      %s291 = sld [smem:[#allocation3 + %s47]]
      %p292 = scmp.eq.s32.totalorder %s291, 0
      %s293 = sld [smem:[#allocation4 + %s47]]
      %s294 = scalar_select %p292, %s293, 0
      %s295 = sld [smem:[#allocation3 + %s54]]
      %p296 = scmp.eq.s32.totalorder %s295, 0
      %s297 = sld [smem:[#allocation4 + %s54]]
      %s298 = scalar_select %p296, %s297, 0
      %s299 = ssub.s32 %s294, %s298
      %p300 = scmp.eq.s32.totalorder %s299, 0
      %s302 = sadd.s32 %s301, 1
      %s303 = scalar_select %p300, %s301, %s302
      %p306 = pneg %p300
      %p307 = scmp.eq.s32.totalorder %s47, 1
      %p308 = por %p306, %p307
      %p309 = scmp.ne.s32.totalorder %s301, %s304
      %p310 = scmp.eq.s32.totalorder %s47, 0
      %p311 = por %p309, %p310
      %p312 = scmp.ne.s32.totalorder %s301, %s304
      %p313 = scmp.eq.s32.totalorder %s52, 1
      %p314 = por %p312, %p313
      %p315 = scmp.ne.s32.totalorder %s304, %s305
      %p316 = scmp.eq.s32.totalorder %s52, 0
      %p317 = por %p315, %p316
      %p318 = scmp.ne.s32.totalorder %s304, %s305
      %p319 = scmp.eq.s32.totalorder %s53, 1
      %p320 = por %p318, %p319
      %p322 = scmp.ne.s32.totalorder %s305, %s321
      %p323 = scmp.eq.s32.totalorder %s53, 0
      %p324 = por %p322, %p323
      %s325 = sld [smem:[#allocation3 + %s47]]
      %p326 = scmp.eq.s32.totalorder %s325, 1
      %s327 = sld [smem:[#allocation4 + %s47]]
      %s328 = scalar_select %p326, %s327, 0
      %s329 = sld [smem:[#allocation3 + %s54]]
      %p330 = scmp.eq.s32.totalorder %s329, 1
      %s331 = sld [smem:[#allocation4 + %s54]]
      %s332 = scalar_select %p330, %s331, 0
      %s333 = ssub.s32 %s328, %s332
      %p334 = scmp.eq.s32.totalorder %s333, 0
      %s336 = sadd.s32 %s335, 1
      %s337 = scalar_select %p334, %s335, %s336
      %p340 = pneg %p334
      %p341 = scmp.eq.s32.totalorder %s47, 1
      %p342 = por %p340, %p341
      %p343 = scmp.ne.s32.totalorder %s335, %s338
      %p344 = scmp.eq.s32.totalorder %s47, 0
      %p345 = por %p343, %p344
      %p346 = scmp.ne.s32.totalorder %s335, %s338
      %p347 = scmp.eq.s32.totalorder %s52, 1
      %p348 = por %p346, %p347
      %p349 = scmp.ne.s32.totalorder %s338, %s339
      %p350 = scmp.eq.s32.totalorder %s52, 0
      %p351 = por %p349, %p350
      %p352 = scmp.ne.s32.totalorder %s338, %s339
      %p353 = scmp.eq.s32.totalorder %s53, 1
      %p354 = por %p352, %p353
      %p356 = scmp.ne.s32.totalorder %s339, %s355
      %p357 = scmp.eq.s32.totalorder %s53, 0
      %p358 = por %p356, %p357
      %p359 = scmp.le.s32.totalorder 1, %s47
      %p360 = scmp.lt.s32.totalorder %s47, 3
      %p361 = pnand %p359, %p360
      %p362 = pneg %p361
      // Predicated region
      $region9: #{encoder_forward.1} parent=5 // pred_check
        _
      $region10: #{encoder_forward.1} parent=5 // pred_check_branch
        %364 = sbr.rel (%p361) target = $region12
      $region11: #{encoder_forward.1} parent=5 // pred_region
        %s365 = ssub.s32 %s47, 1
        // Predicated region
        $region13: #{encoder_forward.1} parent=11 // pred_check
          %p366 = pneg %p102
        $region14: #{encoder_forward.1} parent=11 // pred_check_branch
          %368 = sbr.rel (%p366) target = $region16
        $region15: #{encoder_forward.1} parent=11 // pred_region
          %s370 = ssub.s32 256, 256
          %371 = vsyncadd [#allocation10], %s370
          %s372 = sshll.u32 [#allocation9], 4
          %s373 = int_to_ptr.vmem [resolvable:$true] %s372
          %378 = dma.hbm_to_vmem [thread:$0]  %s4, 256, %s373, [#allocation10], 128, 128, 8
        $region16: #{encoder_forward.1} parent=11 // pred_fallthru
          _
        // Predicated region
        $region17: #{encoder_forward.1} parent=11 // pred_check
          %p379 = pneg %p123
        $region18: #{encoder_forward.1} parent=11 // pred_check_branch
          %381 = sbr.rel (%p379) target = $region20
        $region19: #{encoder_forward.1} parent=11 // pred_region
          _
        $region20: #{encoder_forward.1} parent=11 // pred_fallthru
          _
        // Predicated region
        $region21: #{encoder_forward.1} parent=11 // pred_check
          %p382 = pneg %p144
        $region22: #{encoder_forward.1} parent=11 // pred_check_branch
          %384 = sbr.rel (%p382) target = $region24
        $region23: #{encoder_forward.1} parent=11 // pred_region
          _
        $region24: #{encoder_forward.1} parent=11 // pred_fallthru
          _
        // Predicated region
        $region25: #{encoder_forward.1} parent=11 // pred_check
          %p385 = pneg %p165
        $region26: #{encoder_forward.1} parent=11 // pred_check_branch
          %387 = sbr.rel (%p385) target = $region28
        $region27: #{encoder_forward.1} parent=11 // pred_region
          %s389 = ssub.s32 16, 16
          %390 = vsyncadd [#allocation10], %s389
          %s392 = sshll.u32 [#allocation11], 4
          %s393 = int_to_ptr.vmem [resolvable:$true] %s392
          %395 = dma.hbm_to_vmem [thread:$0]  %s7, 16, %s393, [#allocation10]
        $region28: #{encoder_forward.1} parent=11 // pred_fallthru
          _
        // Predicated region
        $region29: #{encoder_forward.1} parent=11 // pred_check
          %p396 = pneg %p220
        $region30: #{encoder_forward.1} parent=11 // pred_check_branch
          %398 = sbr.rel (%p396) target = $region32
        $region31: #{encoder_forward.1} parent=11 // pred_region
          %s400 = ssub.s32 256, 256
          %401 = vsyncadd [#allocation13], %s400
          %s402 = sshll.u32 [#allocation12], 4
          %s403 = int_to_ptr.vmem [resolvable:$true] %s402
          %408 = dma.hbm_to_vmem [thread:$0]  %s9, 256, %s403, [#allocation13], 128, 128, 8
        $region32: #{encoder_forward.1} parent=11 // pred_fallthru
          _
        // Predicated region
        $region33: #{encoder_forward.1} parent=11 // pred_check
          %p409 = pneg %p241
        $region34: #{encoder_forward.1} parent=11 // pred_check_branch
          %411 = sbr.rel (%p409) target = $region36
        $region35: #{encoder_forward.1} parent=11 // pred_region
          %s413 = ssub.s32 16, 16
          %414 = vsyncadd [#allocation13], %s413
          %s416 = sshll.u32 [#allocation14], 4
          %s417 = int_to_ptr.vmem [resolvable:$true] %s416
          %419 = dma.hbm_to_vmem [thread:$0]  %s10, 16, %s417, [#allocation13]
        $region36: #{encoder_forward.1} parent=11 // pred_fallthru
          _
        // Predicated region
        $region37: #{encoder_forward.1} parent=11 // pred_check
          %p420 = pneg %p262
        $region38: #{encoder_forward.1} parent=11 // pred_check_branch
          %422 = sbr.rel (%p420) target = $region40
        $region39: #{encoder_forward.1} parent=11 // pred_region
          %s424 = ssub.s32 512, 512
          %425 = vsyncadd [#allocation16], %s424
          %s426 = sshll.u32 [#allocation15], 4
          %s427 = int_to_ptr.vmem [resolvable:$true] %s426
          %432 = dma.hbm_to_vmem [thread:$0]  %s11, 512, %s427, [#allocation16], 128, 128, 8
        $region40: #{encoder_forward.1} parent=11 // pred_fallthru
          _
        // Predicated region
        $region41: #{encoder_forward.1} parent=11 // pred_check
          %p433 = pneg %p283
        $region42: #{encoder_forward.1} parent=11 // pred_check_branch
          %435 = sbr.rel (%p433) target = $region44
        $region43: #{encoder_forward.1} parent=11 // pred_region
          %s437 = ssub.s32 16, 16
          %438 = vsyncadd [#allocation16], %s437
          %s440 = sshll.u32 [#allocation17], 4
          %s441 = int_to_ptr.vmem [resolvable:$true] %s440
          %443 = dma.hbm_to_vmem [thread:$0]  %s12, 16, %s441, [#allocation16]
        $region44: #{encoder_forward.1} parent=11 // pred_fallthru
          _
      $region12: #{encoder_forward.1} parent=5 // pred_fallthru
        _
      %p444 = scmp.lt.s32.totalorder %s47, 2
      // Predicated region
      $region45: #{encoder_forward.1} parent=5 // pred_check
        %p445 = pneg %p444
      $region46: #{encoder_forward.1} parent=5 // pred_check_branch
        %447 = sbr.rel (%p445) target = $region48
      $region47: #{encoder_forward.1} parent=5 // pred_region
        // Predicated region
        $region49: #{encoder_forward.1} parent=47 // pred_check
          %p448 = pneg %p75
        $region50: #{encoder_forward.1} parent=47 // pred_check_branch
          %450 = sbr.rel (%p448) target = $region52
        $region51: #{encoder_forward.1} parent=47 // pred_region
          %s451 = sand.u32 %s65, 1
          %s452 = scalar_lea.sflag [#allocation7], %s451
          %s453 = sand.u32 %s65, 1
          %s454 = smul.addr %s453, 8
          %s455 = scalar_lea.vmem [#allocation6], %s454
          %s456 = sld [smem:[#allocation3 + %s47]]
          %p457 = scmp.eq.s32.totalorder %s456, 0
          %s458 = sld [smem:[#allocation4 + %s47]]
          %s459 = scalar_select %p457, %s458, 0
          %s461 = ssub.s32 128, 128
          %462 = vsyncadd %s452, %s461
          %s463 = smul.addr %s459, 128
          %s464 = scalar_lea.hbm %s3, %s463
          %s466 = sshll.u32 %s455, 4
          %s467 = int_to_ptr.vmem [resolvable:$true] %s466
          %469 = dma.hbm_to_vmem [thread:$0]  %s464, 128, %s467, %s452
        $region52: #{encoder_forward.1} parent=47 // pred_fallthru
          _
        // Predicated region
        $region53: #{encoder_forward.1} parent=47 // pred_check
          %p470 = pneg %p193
        $region54: #{encoder_forward.1} parent=47 // pred_check_branch
          %472 = sbr.rel (%p470) target = $region56
        $region55: #{encoder_forward.1} parent=47 // pred_region
          %s473 = sld [smem:[#allocation3 + %s47]]
          %p474 = scmp.eq.s32.totalorder %s473, 1
          %s475 = sld [smem:[#allocation4 + %s47]]
          %s476 = scalar_select %p474, %s475, 0
          %s477 = smul.u32 2, %s476
          %p478 = scmp.lt.s32.totalorder %s477, 1
          %s479 = scalar_select %p478, %s477, 1
          %s480 = smul.addr %s479, 8
          %s481 = scalar_lea.vmem %s8, %s480
          %s482 = sld [smem:[#allocation3 + %s47]]
          %p483 = scmp.eq.s32.totalorder %s482, 1
          %s484 = sld [smem:[#allocation4 + %s47]]
          %s485 = scalar_select %p483, %s484, 0
          %s486 = smul.u32 2, %s485
        $region56: #{encoder_forward.1} parent=47 // pred_fallthru
          _
      $region48: #{encoder_forward.1} parent=5 // pred_fallthru
        _
      %p487 = scmp.le.s32.totalorder 1, %s47
      %p488 = scmp.lt.s32.totalorder %s47, 3
      %p489 = pnand %p487, %p488
      %p490 = pneg %p489
      // Predicated region
      $region57: #{encoder_forward.1} parent=5 // pred_check
        _
      $region58: #{encoder_forward.1} parent=5 // pred_check_branch
        %492 = sbr.rel (%p489) target = $region60
      $region59: #{encoder_forward.1} parent=5 // pred_region
        %s493 = ssub.s32 %s47, 1
        %s494 = sand.u32 %s68, 1
        %s495 = scalar_lea.sflag [#allocation7], %s494
        %s496 = sand.u32 %s68, 1
        %s497 = smul.addr %s496, 8
        %s498 = scalar_lea.vmem [#allocation6], %s497
        // Predicated region
        $region61: #{encoder_forward.1} parent=59 // pred_check
          %p499 = pneg %p81
        $region62: #{encoder_forward.1} parent=59 // pred_check_branch
          %501 = sbr.rel (%p499) target = $region64
        $region63: #{encoder_forward.1} parent=59 // pred_region
          %502 = dma.done %s495, 128
        $region64: #{encoder_forward.1} parent=59 // pred_fallthru
          _
        // Predicated region
        $region65: #{encoder_forward.1} parent=59 // pred_check
          %p503 = pneg %p102
        $region66: #{encoder_forward.1} parent=59 // pred_check_branch
          %505 = sbr.rel (%p503) target = $region68
        $region67: #{encoder_forward.1} parent=59 // pred_region
          %506 = dma.done [#allocation10], 256
        $region68: #{encoder_forward.1} parent=59 // pred_fallthru
          _
        // Predicated region
        $region69: #{encoder_forward.1} parent=59 // pred_check
          %p507 = pneg %p165
        $region70: #{encoder_forward.1} parent=59 // pred_check_branch
          %509 = sbr.rel (%p507) target = $region72
        $region71: #{encoder_forward.1} parent=59 // pred_region
          %510 = dma.done [#allocation10], 16
        $region72: #{encoder_forward.1} parent=59 // pred_fallthru
          _
        // Predicated region
        $region73: #{encoder_forward.1} parent=59 // pred_check
          %p511 = pneg %p220
        $region74: #{encoder_forward.1} parent=59 // pred_check_branch
          %513 = sbr.rel (%p511) target = $region76
        $region75: #{encoder_forward.1} parent=59 // pred_region
          %514 = dma.done [#allocation13], 256
        $region76: #{encoder_forward.1} parent=59 // pred_fallthru
          _
        // Predicated region
        $region77: #{encoder_forward.1} parent=59 // pred_check
          %p515 = pneg %p241
        $region78: #{encoder_forward.1} parent=59 // pred_check_branch
          %517 = sbr.rel (%p515) target = $region80
        $region79: #{encoder_forward.1} parent=59 // pred_region
          %518 = dma.done [#allocation13], 16
        $region80: #{encoder_forward.1} parent=59 // pred_fallthru
          _
        // Predicated region
        $region81: #{encoder_forward.1} parent=59 // pred_check
          %p519 = pneg %p262
        $region82: #{encoder_forward.1} parent=59 // pred_check_branch
          %521 = sbr.rel (%p519) target = $region84
        $region83: #{encoder_forward.1} parent=59 // pred_region
          %522 = dma.done [#allocation16], 512
        $region84: #{encoder_forward.1} parent=59 // pred_fallthru
          _
        // Predicated region
        $region85: #{encoder_forward.1} parent=59 // pred_check
          %p523 = pneg %p283
        $region86: #{encoder_forward.1} parent=59 // pred_check_branch
          %525 = sbr.rel (%p523) target = $region88
        $region87: #{encoder_forward.1} parent=59 // pred_region
          %526 = dma.done [#allocation16], 16
        $region88: #{encoder_forward.1} parent=59 // pred_fallthru
          _
        %s527 = sand.u32 %s68, 1
        %s528 = scalar_lea.sflag [#allocation7], %s527
        %s529 = sand.u32 %s68, 1
        %s530 = smul.addr %s529, 8
        %s531 = scalar_lea.vmem [#allocation6], %s530
        %p532 = pneg %p81
        %p533 = pneg %p78
        %p534 = pneg %p102
        %p535 = pneg %p99
        %p536 = pneg %p123
        %p537 = pneg %p120
        %p538 = pneg %p144
        %p539 = pneg %p141
        %p540 = pneg %p165
        %p541 = pneg %p162
        %s542 = sld [smem:[#allocation3 + %s52]]
        %p543 = scmp.eq.s32.totalorder %s542, 1
        %s544 = sld [smem:[#allocation4 + %s52]]
        %s545 = scalar_select %p543, %s544, 0
        %s546 = smul.u32 2, %s545
        %p547 = scmp.lt.s32.totalorder %s546, 1
        %s548 = scalar_select %p547, %s546, 1
        %s549 = smul.addr %s548, 8
        %s550 = scalar_lea.vmem %s8, %s549
        %p551 = pneg %p199
        %p552 = pneg %p196
        %p553 = pneg %p220
        %p554 = pneg %p217
        %p555 = pneg %p241
        %p556 = pneg %p238
        %p557 = pneg %p262
        %p558 = pneg %p259
        %p559 = pneg %p283
        %p560 = pneg %p280
        %p561 = pneg %p317
        %p562 = pneg %p314
        %s563 = sand.u32 %s304, 1
        %s564 = scalar_lea.sflag [#allocation8], %s563
        %s565 = sand.u32 %s304, 1
        %s566 = smul.addr %s565, 8
        %s567 = scalar_lea.vmem [#allocation18], %s566
        %p568 = pneg %p351
        %p569 = pneg %p348
        %s570 = sand.u32 %s338, 1
        %s571 = scalar_lea.sflag [#allocation20], %s570
        %s572 = sand.u32 %s338, 1
        %s573 = smul.addr %s572, 16
        %s574 = scalar_lea.vmem [#allocation19], %s573
        %s575 = sld [smem:[#allocation3 + %s52]]
        %p576 = scmp.eq.s32.totalorder %s575, 0
        %s577 = sld [smem:[#allocation4 + %s52]]
        %s578 = scalar_select %p576, %s577, 0
        %s579 = sld [smem:[#allocation3 + %s52]]
        %p580 = scmp.eq.s32.totalorder %s579, 1
        %s581 = sld [smem:[#allocation4 + %s52]]
        %s582 = scalar_select %p580, %s581, 0
        %s583 = smul.u32 2, %s582
        %p584 = scmp.lt.s32.totalorder %s583, 1
        %s585 = scalar_select %p584, %s583, 1
        %s586 = smul.addr %s585, 8
        %s587 = scalar_lea.vmem %s8, %s586
        %s588 = sld [smem:[#allocation3 + %s52]]
        %p589 = scmp.eq.s32.totalorder %s588, 1
        %s590 = sld [smem:[#allocation4 + %s52]]
        %s591 = scalar_select %p589, %s590, 0
        %s592 = smul.u32 2, %s591
        %s593 = sld [smem:[#allocation3 + %s52]]
        %p594 = scmp.eq.s32.totalorder %s593, 0
        %s595 = sld [smem:[#allocation4 + %s52]]
        %s596 = scalar_select %p594, %s595, 0
        %s597 = sld [smem:[#allocation3 + %s52]]
        %p598 = scmp.eq.s32.totalorder %s597, 1
        %s599 = sld [smem:[#allocation4 + %s52]]
        %s600 = scalar_select %p598, %s599, 0
        %s601 = smul.u32 2, %s600
        %s602 = sld [smem:[#allocation3 + %s52]]
        %p603 = scmp.eq.s32.totalorder %s602, 0
        // Predicated region
        $region89: #{encoder_forward.1} parent=59 // pred_check
          %p604 = pneg %p603
        $region90: #{encoder_forward.1} parent=59 // pred_check_branch
          %606 = sbr.rel (%p604) target = $region92
        $region91: #{encoder_forward.1} parent=59 // pred_region
          %v607 = vld [vmem:[%s498] sm:$0xff]
          %v608 = vld [vmem:[#allocation9] sm:$0xff]
          %v609 = vld [vmem:[#allocation9 + $0x8] sm:$0xff]
          %v610 = vld [vmem:[%s5] sm:$0x1]
          %v611 = vld [vmem:[%s6] sm:$0xff]
          %v612 = vld [vmem:[%s6 + $0x8] sm:$0xff]
          %v613 = vld [vmem:[%s6 + $0x10] sm:$0xff]
          %v614 = vld [vmem:[%s6 + $0x18] sm:$0xff]
          %v615 = vld [vmem:[#allocation11] sm:$0x1]
          %s616 = sld [smem:[#allocation5]]
          %v618 = vlaneseq
          %v619 = vshrl.u32 %v618, 7
          %v620 = vsub.s32 0, %v619
          %v621 = vrot.slane %v610, %v620
          %vm623 = vcmask 130048
          %v625 = vsel %vm623, %v607, 0
          %627 = vmatprep.subr.mxu0 0.0
          %628 = vmatpush1.msra.mxu0 %v608
          %629 = vmatprep.subr.mxu0 0.0
          %630 = vmatpush1.msra.mxu0 %v609
          %631 = vmatprep.subr.mxu0 0.0
          %632 = vmatpush1.msra.mxu0 0.0
          %633 = vmatprep.subr.mxu0 0.0
          %634 = vmatpush1.msra.mxu0 0.0
          %635 = vmatprep.subr.mxu0 0.0
          %636 = vmatpush1.msra.mxu0 0.0
          %637 = vmatprep.subr.mxu0 0.0
          %638 = vmatpush1.msra.mxu0 0.0
          %639 = vmatprep.subr.mxu0 0.0
          %640 = vmatpush1.msra.mxu0 0.0
          %641 = vmatprep.subr.mxu0 0.0
          %642 = vmatpush1.msra.mxu0 0.0
          %643 = vmatprep.subr.mxu0 0.0
          %644 = vmatpush1.msra.mxu0 0.0
          %645 = vmatprep.subr.mxu0 0.0
          %646 = vmatpush1.msra.mxu0 0.0
          %647 = vmatprep.subr.mxu0 0.0
          %648 = vmatpush1.msra.mxu0 0.0
          %649 = vmatprep.subr.mxu0 0.0
          %650 = vmatpush1.msra.mxu0 0.0
          %651 = vmatprep.subr.mxu0 0.0
          %652 = vmatpush1.msra.mxu0 0.0
          %653 = vmatprep.subr.mxu0 0.0
          %654 = vmatpush1.msra.mxu0 0.0
          %655 = vmatprep.subr.mxu0 0.0
          %656 = vmatpush1.msra.mxu0 0.0
          %657 = vmatprep.subr.mxu0 0.0
          %658 = vmatpush1.msra.mxu0 0.0
          %659 = vmatprep.subr.mxu0 0.0
          %660 = vmatpush1.msra.mxu0 0.0
          %661 = vmatprep.subr.mxu0 0.0
          %662 = vmatpush1.msra.mxu0 0.0
          %663 = vmatprep.subr.mxu0 0.0
          %664 = vmatpush1.msra.mxu0 0.0
          %665 = vmatprep.subr.mxu0 0.0
          %666 = vmatpush1.msra.mxu0 0.0
          %667 = vmatprep.subr.mxu0 0.0
          %668 = vmatpush1.msra.mxu0 0.0
          %669 = vmatprep.subr.mxu0 0.0
          %670 = vmatpush1.msra.mxu0 0.0
          %671 = vmatprep.subr.mxu0 0.0
          %672 = vmatpush1.msra.mxu0 0.0
          %673 = vmatprep.subr.mxu0 0.0
          %674 = vmatpush1.msra.mxu0 0.0
          %675 = vmatprep.subr.mxu0 0.0
          %676 = vmatpush1.msra.mxu0 0.0
          %677 = vmatprep.subr.mxu0 0.0
          %678 = vmatpush1.msra.mxu0 0.0
          %679 = vmatprep.subr.mxu0 0.0
          %680 = vmatpush1.msra.mxu0 0.0
          %681 = vmatprep.subr.mxu0 0.0
          %682 = vmatpush1.msra.mxu0 0.0
          %683 = vmatprep.subr.mxu0 0.0
          %684 = vmatpush1.msra.mxu0 0.0
          %685 = vmatprep.subr.mxu0 0.0
          %686 = vmatpush1.msra.mxu0 0.0
          %687 = vmatprep.subr.mxu0 0.0
          %688 = vmatpush1.msra.mxu0 0.0
          %689 = vmatprep.subr.mxu0 0.0
          %690 = vmatpush1.msra.mxu0 0.0
          %691 = vmatprep.mubr.f32.mxu0 0.0
          %692 = vmatmul.mubr.f32.gmra.mrb[0].mxu0 %v625
          %v693 = vpop.f32.mrb[0].mxu0
          %v694 = vadd.f32 %v621, %v693
          %v695 = vpop.f32.mrb[0].mxu0
          %696 = vdwg.mxu0
          %vm697 = vcmp.gt.f32.partialorder %v694, 0.0
          %v698 = vstv %s616
          %v699 = vmul.f32 %v698, %v694
          %v700 = vsel %vm697, %v694, %v699
          %v702 = vlaneseq
          %v703 = vshrl.u32 %v702, 7
          %v704 = vsub.s32 0, %v703
          %v705 = vrot.slane %v615, %v704
          %vm707 = vcmask 261120
          %v709 = vsel %vm707, %v700, 0
          %711 = vmatprep.subr.mxu0 0.0
          %712 = vmatpush1.msra.mxu0 %v611
          %713 = vmatprep.subr.mxu0 0.0
          %714 = vmatpush1.msra.mxu0 %v612
          %715 = vmatprep.subr.mxu0 0.0
          %716 = vmatpush1.msra.mxu0 %v613
          %717 = vmatprep.subr.mxu0 0.0
          %718 = vmatpush1.msra.mxu0 %v614
          %719 = vmatprep.subr.mxu0 0.0
          %720 = vmatpush1.msra.mxu0 0.0
          %721 = vmatprep.subr.mxu0 0.0
          %722 = vmatpush1.msra.mxu0 0.0
          %723 = vmatprep.subr.mxu0 0.0
          %724 = vmatpush1.msra.mxu0 0.0
          %725 = vmatprep.subr.mxu0 0.0
          %726 = vmatpush1.msra.mxu0 0.0
          %727 = vmatprep.subr.mxu0 0.0
          %728 = vmatpush1.msra.mxu0 0.0
          %729 = vmatprep.subr.mxu0 0.0
          %730 = vmatpush1.msra.mxu0 0.0
          %731 = vmatprep.subr.mxu0 0.0
          %732 = vmatpush1.msra.mxu0 0.0
          %733 = vmatprep.subr.mxu0 0.0
          %734 = vmatpush1.msra.mxu0 0.0
          %735 = vmatprep.subr.mxu0 0.0
          %736 = vmatpush1.msra.mxu0 0.0
          %737 = vmatprep.subr.mxu0 0.0
          %738 = vmatpush1.msra.mxu0 0.0
          %739 = vmatprep.subr.mxu0 0.0
          %740 = vmatpush1.msra.mxu0 0.0
          %741 = vmatprep.subr.mxu0 0.0
          %742 = vmatpush1.msra.mxu0 0.0
          %743 = vmatprep.subr.mxu0 0.0
          %744 = vmatpush1.msra.mxu0 0.0
          %745 = vmatprep.subr.mxu0 0.0
          %746 = vmatpush1.msra.mxu0 0.0
          %747 = vmatprep.subr.mxu0 0.0
          %748 = vmatpush1.msra.mxu0 0.0
          %749 = vmatprep.subr.mxu0 0.0
          %750 = vmatpush1.msra.mxu0 0.0
          %751 = vmatprep.subr.mxu0 0.0
          %752 = vmatpush1.msra.mxu0 0.0
          %753 = vmatprep.subr.mxu0 0.0
          %754 = vmatpush1.msra.mxu0 0.0
          %755 = vmatprep.subr.mxu0 0.0
          %756 = vmatpush1.msra.mxu0 0.0
          %757 = vmatprep.subr.mxu0 0.0
          %758 = vmatpush1.msra.mxu0 0.0
          %759 = vmatprep.subr.mxu0 0.0
          %760 = vmatpush1.msra.mxu0 0.0
          %761 = vmatprep.subr.mxu0 0.0
          %762 = vmatpush1.msra.mxu0 0.0
          %763 = vmatprep.subr.mxu0 0.0
          %764 = vmatpush1.msra.mxu0 0.0
          %765 = vmatprep.subr.mxu0 0.0
          %766 = vmatpush1.msra.mxu0 0.0
          %767 = vmatprep.subr.mxu0 0.0
          %768 = vmatpush1.msra.mxu0 0.0
          %769 = vmatprep.subr.mxu0 0.0
          %770 = vmatpush1.msra.mxu0 0.0
          %771 = vmatprep.subr.mxu0 0.0
          %772 = vmatpush1.msra.mxu0 0.0
          %773 = vmatprep.subr.mxu0 0.0
          %774 = vmatpush1.msra.mxu0 0.0
          %775 = vmatprep.mubr.f32.mxu0 0.0
          %776 = vmatmul.mubr.f32.gmra.mrb[0].mxu0 %v709
          %v777 = vpop.f32.mrb[0].mxu0
          %v778 = vadd.f32 %v705, %v777
          %v779 = vpop.f32.mrb[0].mxu0
          %780 = vdwg.mxu0
          %781 = vst.msk [vmem:[%s567] sm:$0xff] %vm707, %v778
        $region92: #{encoder_forward.1} parent=59 // pred_fallthru
          _
        %p782 = scmp.eq.s32.totalorder %s602, 1
        // Predicated region
        $region93: #{encoder_forward.1} parent=59 // pred_check
          %p783 = pneg %p782
        $region94: #{encoder_forward.1} parent=59 // pred_check_branch
          %785 = sbr.rel (%p783) target = $region96
        $region95: #{encoder_forward.1} parent=59 // pred_region
          %v786 = vld [vmem:[%s587] sm:$0xff]
          %v787 = vld [vmem:[%s587 + $0x8] sm:$0xff]
          %v788 = vld [vmem:[#allocation12] sm:$0xff]
          %v789 = vld [vmem:[#allocation12 + $0x8] sm:$0xf]
          %v790 = vld [vmem:[#allocation14] sm:$0x1]
          %v791 = vld [vmem:[#allocation15] sm:$0xff]
          %v792 = vld [vmem:[#allocation15 + $0x8] sm:$0xff]
          %v793 = vld [vmem:[#allocation15 + $0x10] sm:$0xff]
          %v794 = vld [vmem:[#allocation15 + $0x18] sm:$0xff]
          %v795 = vld [vmem:[#allocation17] sm:$0x1]
          %s796 = sld [smem:[#allocation5 + $0x1]]
          %v798 = vlaneseq
          %v799 = vshrl.u32 %v798, 7
          %v800 = vsub.s32 0, %v799
          %v801 = vrot.slane %v790, %v800
          %vm803 = vcmask 97280
          %v805 = vsel %vm803, %v786, 0
          %v808 = vsel %vm803, %v787, 0
          %vm810 = vcmask 1043456
          %v812 = vsel %vm810, %v789, 0
          %814 = vmatprep.subr.mxu0 0.0
          %815 = vmatpush1.msra.mxu0 %v788
          %816 = vmatprep.subr.mxu0 0.0
          %817 = vmatpush1.msra.mxu0 %v812
          %818 = vmatprep.subr.mxu0 0.0
          %819 = vmatpush1.msra.mxu0 0.0
          %820 = vmatprep.subr.mxu0 0.0
          %821 = vmatpush1.msra.mxu0 0.0
          %822 = vmatprep.subr.mxu0 0.0
          %823 = vmatpush1.msra.mxu0 0.0
          %824 = vmatprep.subr.mxu0 0.0
          %825 = vmatpush1.msra.mxu0 0.0
          %826 = vmatprep.subr.mxu0 0.0
          %827 = vmatpush1.msra.mxu0 0.0
          %828 = vmatprep.subr.mxu0 0.0
          %829 = vmatpush1.msra.mxu0 0.0
          %830 = vmatprep.subr.mxu0 0.0
          %831 = vmatpush1.msra.mxu0 0.0
          %832 = vmatprep.subr.mxu0 0.0
          %833 = vmatpush1.msra.mxu0 0.0
          %834 = vmatprep.subr.mxu0 0.0
          %835 = vmatpush1.msra.mxu0 0.0
          %836 = vmatprep.subr.mxu0 0.0
          %837 = vmatpush1.msra.mxu0 0.0
          %838 = vmatprep.subr.mxu0 0.0
          %839 = vmatpush1.msra.mxu0 0.0
          %840 = vmatprep.subr.mxu0 0.0
          %841 = vmatpush1.msra.mxu0 0.0
          %842 = vmatprep.subr.mxu0 0.0
          %843 = vmatpush1.msra.mxu0 0.0
          %844 = vmatprep.subr.mxu0 0.0
          %845 = vmatpush1.msra.mxu0 0.0
          %846 = vmatprep.subr.mxu0 0.0
          %847 = vmatpush1.msra.mxu0 0.0
          %848 = vmatprep.subr.mxu0 0.0
          %849 = vmatpush1.msra.mxu0 0.0
          %850 = vmatprep.subr.mxu0 0.0
          %851 = vmatpush1.msra.mxu0 0.0
          %852 = vmatprep.subr.mxu0 0.0
          %853 = vmatpush1.msra.mxu0 0.0
          %854 = vmatprep.subr.mxu0 0.0
          %855 = vmatpush1.msra.mxu0 0.0
          %856 = vmatprep.subr.mxu0 0.0
          %857 = vmatpush1.msra.mxu0 0.0
          %858 = vmatprep.subr.mxu0 0.0
          %859 = vmatpush1.msra.mxu0 0.0
          %860 = vmatprep.subr.mxu0 0.0
          %861 = vmatpush1.msra.mxu0 0.0
          %862 = vmatprep.subr.mxu0 0.0
          %863 = vmatpush1.msra.mxu0 0.0
          %864 = vmatprep.subr.mxu0 0.0
          %865 = vmatpush1.msra.mxu0 0.0
          %866 = vmatprep.subr.mxu0 0.0
          %867 = vmatpush1.msra.mxu0 0.0
          %868 = vmatprep.subr.mxu0 0.0
          %869 = vmatpush1.msra.mxu0 0.0
          %870 = vmatprep.subr.mxu0 0.0
          %871 = vmatpush1.msra.mxu0 0.0
          %872 = vmatprep.subr.mxu0 0.0
          %873 = vmatpush1.msra.mxu0 0.0
          %874 = vmatprep.subr.mxu0 0.0
          %875 = vmatpush1.msra.mxu0 0.0
          %876 = vmatprep.subr.mxu0 0.0
          %877 = vmatpush1.msra.mxu0 0.0
          %878 = vmatprep.mubr.f32.mxu0 0.0
          %879 = vmatmul.mubr.f32.gmra.mrb[0].mxu0 %v805
          %v880 = vpop.f32.mrb[0].mxu0
          %v881 = vadd.f32 %v801, %v880
          %v882 = vpop.f32.mrb[0].mxu0
          %883 = vmatprep.mubr.f32.mxu0 0.0
          %884 = vmatmul.mubr.f32.gmra.mrb[0].mxu0 %v808
          %v885 = vpop.f32.mrb[0].mxu0
          %v886 = vadd.f32 %v801, %v885
          %v887 = vpop.f32.mrb[0].mxu0
          %888 = vdwg.mxu0
          %vm889 = vcmp.gt.f32.partialorder %v881, 0.0
          %vm890 = vcmp.gt.f32.partialorder %v886, 0.0
          %v891 = vstv %s796
          %v892 = vmul.f32 %v891, %v881
          %v893 = vmul.f32 %v891, %v886
          %v894 = vsel %vm889, %v881, %v892
          %v895 = vsel %vm890, %v886, %v893
          %v897 = vlaneseq
          %v898 = vshrl.u32 %v897, 7
          %v899 = vsub.s32 0, %v898
          %v900 = vrot.slane %v795, %v899
          %vm902 = vcmask 261120
          %v904 = vsel %vm902, %v894, 0
          %v907 = vsel %vm902, %v895, 0
          %909 = vmatprep.subr.mxu0 0.0
          %910 = vmatpush1.msra.mxu0 %v791
          %911 = vmatprep.subr.mxu0 0.0
          %912 = vmatpush1.msra.mxu0 %v792
          %913 = vmatprep.subr.mxu0 0.0
          %914 = vmatpush1.msra.mxu0 %v793
          %915 = vmatprep.subr.mxu0 0.0
          %916 = vmatpush1.msra.mxu0 %v794
          %917 = vmatprep.subr.mxu0 0.0
          %918 = vmatpush1.msra.mxu0 0.0
          %919 = vmatprep.subr.mxu0 0.0
          %920 = vmatpush1.msra.mxu0 0.0
          %921 = vmatprep.subr.mxu0 0.0
          %922 = vmatpush1.msra.mxu0 0.0
          %923 = vmatprep.subr.mxu0 0.0
          %924 = vmatpush1.msra.mxu0 0.0
          %925 = vmatprep.subr.mxu0 0.0
          %926 = vmatpush1.msra.mxu0 0.0
          %927 = vmatprep.subr.mxu0 0.0
          %928 = vmatpush1.msra.mxu0 0.0
          %929 = vmatprep.subr.mxu0 0.0
          %930 = vmatpush1.msra.mxu0 0.0
          %931 = vmatprep.subr.mxu0 0.0
          %932 = vmatpush1.msra.mxu0 0.0
          %933 = vmatprep.subr.mxu0 0.0
          %934 = vmatpush1.msra.mxu0 0.0
          %935 = vmatprep.subr.mxu0 0.0
          %936 = vmatpush1.msra.mxu0 0.0
          %937 = vmatprep.subr.mxu0 0.0
          %938 = vmatpush1.msra.mxu0 0.0
          %939 = vmatprep.subr.mxu0 0.0
          %940 = vmatpush1.msra.mxu0 0.0
          %941 = vmatprep.subr.mxu0 0.0
          %942 = vmatpush1.msra.mxu0 0.0
          %943 = vmatprep.subr.mxu0 0.0
          %944 = vmatpush1.msra.mxu0 0.0
          %945 = vmatprep.subr.mxu0 0.0
          %946 = vmatpush1.msra.mxu0 0.0
          %947 = vmatprep.subr.mxu0 0.0
          %948 = vmatpush1.msra.mxu0 0.0
          %949 = vmatprep.subr.mxu0 0.0
          %950 = vmatpush1.msra.mxu0 0.0
          %951 = vmatprep.subr.mxu0 0.0
          %952 = vmatpush1.msra.mxu0 0.0
          %953 = vmatprep.subr.mxu0 0.0
          %954 = vmatpush1.msra.mxu0 0.0
          %955 = vmatprep.subr.mxu0 0.0
          %956 = vmatpush1.msra.mxu0 0.0
          %957 = vmatprep.subr.mxu0 0.0
          %958 = vmatpush1.msra.mxu0 0.0
          %959 = vmatprep.subr.mxu0 0.0
          %960 = vmatpush1.msra.mxu0 0.0
          %961 = vmatprep.subr.mxu0 0.0
          %962 = vmatpush1.msra.mxu0 0.0
          %963 = vmatprep.subr.mxu0 0.0
          %964 = vmatpush1.msra.mxu0 0.0
          %965 = vmatprep.subr.mxu0 0.0
          %966 = vmatpush1.msra.mxu0 0.0
          %967 = vmatprep.subr.mxu0 0.0
          %968 = vmatpush1.msra.mxu0 0.0
          %969 = vmatprep.subr.mxu0 0.0
          %970 = vmatpush1.msra.mxu0 0.0
          %971 = vmatprep.subr.mxu0 0.0
          %972 = vmatpush1.msra.mxu0 0.0
          %973 = vmatprep.mubr.f32.mxu0 0.0
          %974 = vmatmul.mubr.f32.gmra.mrb[0].mxu0 %v904
          %v975 = vpop.f32.mrb[0].mxu0
          %v976 = vadd.f32 %v900, %v975
          %v977 = vpop.f32.mrb[0].mxu0
          %978 = vmatprep.mubr.f32.mxu0 0.0
          %979 = vmatmul.mubr.f32.gmra.mrb[0].mxu0 %v907
          %v980 = vpop.f32.mrb[0].mxu0
          %v981 = vadd.f32 %v900, %v980
          %v982 = vpop.f32.mrb[0].mxu0
          %983 = vdwg.mxu0
          %984 = vst.msk [vmem:[%s574] sm:$0xff] %vm902, %v976
          %985 = vst.msk [vmem:[%s574 + $0x8] sm:$0xff] %vm902, %v981
        $region96: #{encoder_forward.1} parent=59 // pred_fallthru
          _
        %s986 = sand.u32 %s304, 1
        %s987 = scalar_lea.sflag [#allocation8], %s986
        %s988 = sand.u32 %s304, 1
        %s989 = smul.addr %s988, 8
        %s990 = scalar_lea.vmem [#allocation18], %s989
        %s991 = sand.u32 %s338, 1
        %s992 = scalar_lea.sflag [#allocation20], %s991
        %s993 = sand.u32 %s338, 1
        %s994 = smul.addr %s993, 16
        %s995 = scalar_lea.vmem [#allocation19], %s994
        // Predicated region
        $region97: #{encoder_forward.1} parent=59 // pred_check
          %p996 = pneg %p314
        $region98: #{encoder_forward.1} parent=59 // pred_check_branch
          %998 = sbr.rel (%p996) target = $region100
        $region99: #{encoder_forward.1} parent=59 // pred_region
          %s999 = sld [smem:[#allocation3 + %s52]]
          %p1000 = scmp.eq.s32.totalorder %s999, 0
          %s1001 = sld [smem:[#allocation4 + %s52]]
          %s1002 = scalar_select %p1000, %s1001, 0
          %s1004 = ssub.s32 128, 128
          %1005 = vsyncadd %s987, %s1004
          %s1006 = smul.addr %s1002, 128
          %s1007 = scalar_lea.hbm %s13, %s1006
          %s1009 = sshll.u32 %s990, 4
          %s1010 = int_to_ptr.vmem [resolvable:$true] %s1009
          %1012 = dma.vmem_to_hbm [thread:$0]  %s1010, 128, %s1007, %s987
        $region100: #{encoder_forward.1} parent=59 // pred_fallthru
          _
        // Predicated region
        $region101: #{encoder_forward.1} parent=59 // pred_check
          %p1013 = pneg %p348
        $region102: #{encoder_forward.1} parent=59 // pred_check_branch
          %1015 = sbr.rel (%p1013) target = $region104
        $region103: #{encoder_forward.1} parent=59 // pred_region
          %s1016 = sld [smem:[#allocation3 + %s52]]
          %p1017 = scmp.eq.s32.totalorder %s1016, 1
          %s1018 = sld [smem:[#allocation4 + %s52]]
          %s1019 = scalar_select %p1017, %s1018, 0
          %s1020 = smul.u32 2, %s1019
          %s1022 = ssub.s32 256, 256
          %1023 = vsyncadd %s992, %s1022
          %s1024 = smul.addr %s1020, 128
          %s1025 = scalar_lea.hbm %s14, %s1024
          %s1026 = sshll.u32 %s995, 4
          %s1027 = int_to_ptr.vmem [resolvable:$true] %s1026
          %1032 = dma.vmem_to_hbm [thread:$0]  %s1027, 256, %s1025, %s992, 128, 128, 8
        $region104: #{encoder_forward.1} parent=59 // pred_fallthru
          _
      $region60: #{encoder_forward.1} parent=5 // pred_fallthru
        _
      %p1033 = scmp.le.s32.totalorder 2, %s47
      // Predicated region
      $region105: #{encoder_forward.1} parent=5 // pred_check
        %p1034 = pneg %p1033
      $region106: #{encoder_forward.1} parent=5 // pred_check_branch
        %1036 = sbr.rel (%p1034) target = $region108
      $region107: #{encoder_forward.1} parent=5 // pred_region
        %s1037 = ssub.s32 %s47, 2
        // Predicated region
        $region109: #{encoder_forward.1} parent=107 // pred_check
          %p1038 = pneg %p320
        $region110: #{encoder_forward.1} parent=107 // pred_check_branch
          %1040 = sbr.rel (%p1038) target = $region112
        $region111: #{encoder_forward.1} parent=107 // pred_region
          %s1041 = sand.u32 %s305, 1
          %s1042 = scalar_lea.sflag [#allocation8], %s1041
          %s1043 = sand.u32 %s305, 1
          %s1044 = smul.addr %s1043, 8
          %s1045 = scalar_lea.vmem [#allocation18], %s1044
          %1046 = dma.done %s1042, 128
        $region112: #{encoder_forward.1} parent=107 // pred_fallthru
          _
        // Predicated region
        $region113: #{encoder_forward.1} parent=107 // pred_check
          %p1047 = pneg %p354
        $region114: #{encoder_forward.1} parent=107 // pred_check_branch
          %1049 = sbr.rel (%p1047) target = $region116
        $region115: #{encoder_forward.1} parent=107 // pred_region
          %s1050 = sand.u32 %s339, 1
          %s1051 = scalar_lea.sflag [#allocation20], %s1050
          %s1052 = sand.u32 %s339, 1
          %s1053 = smul.addr %s1052, 16
          %s1054 = scalar_lea.vmem [#allocation19], %s1053
          %1055 = dma.done %s1051, 256
        $region116: #{encoder_forward.1} parent=107 // pred_fallthru
          _
      $region108: #{encoder_forward.1} parent=5 // pred_fallthru
        _
    $region6: #{encoder_forward.1} parent=1 // loop_footer
      %s51 = sadd.s32 1, %s47
    $region7: #{encoder_forward.1} parent=1 // loop_footer_branch
      %46 = sbr.rel target = $region3
    $region8: #{encoder_forward.1} parent=1 // loop_exit
      _
    %1056 = vsyncpa [#allocation7], 1
    %s1057 = scalar_lea.sflag [#allocation7], 1
    %1058 = vsyncpa %s1057, 1
    %1059 = vsyncpa [#allocation10], 1
    %1060 = vsyncpa [#allocation13], 1
    %1061 = vsyncpa [#allocation16], 1
    %1062 = vsyncpa [#allocation8], 1
    %s1063 = scalar_lea.sflag [#allocation8], 1
    %1064 = vsyncpa %s1063, 1
    %1065 = vsyncpa [#allocation20], 1
    %s1066 = scalar_lea.sflag [#allocation20], 1
    %1067 = vsyncpa %s1066, 1

</llo_original>
